<compile_context>
chip_gen: v6e
topology: v6e:2x2x1
jax: 0.10.0
libtpu: 0.0.40
codegen_flags: <defaults>
</compile_context>

<pallas_src>
import functools

import jax
import jax.numpy as jnp
from jax import lax
from jax.experimental import pallas as pl
from jax.experimental.pallas import tpu as pltpu


def _double_conv_kernel(x_ref, w1_ref, b1_ref, w2_ref, b2_ref, o_ref,
                        p1_ref, p2_ref, *, H, W):
    # x_ref : (1, Cin, H*W)   one image; channels on sublanes, spatial on lanes
    # w1_ref: (Cmid, 9*Cin)   tap-major, channel-minor im2col weight matrix
    # b1_ref: (Cmid, 1)
    # w2_ref: (Cout, 9*Cmid)
    # b2_ref: (Cout, 1)
    # o_ref : (1, Cout, H*W)  NCHW-native output (lane-dense store)
    # p1_ref: VMEM (9*Cin,  H*W) im2col scratch for conv1
    # p2_ref: VMEM (9*Cmid, H*W) im2col scratch for conv2
    HW = H * W

    # Static border masks over the flattened spatial (lane) axis (0/1 floats).
    pos = lax.broadcasted_iota(jnp.int32, (1, HW), 1)
    if (W & (W - 1)) == 0:
        col = jnp.bitwise_and(pos, W - 1)          # pos % W (power-of-two path)
    else:
        col = pos % W                              # general fallback
    not_top    = (pos >= W).astype(jnp.float32)          # y >= 1
    not_bottom = (pos < (H - 1) * W).astype(jnp.float32)  # y <= H-2
    not_left   = (col >= 1).astype(jnp.float32)           # x >= 1
    not_right  = (col < (W - 1)).astype(jnp.float32)      # x <= W-2

    def im2col(a, dst_ref):
        """a: (C, H*W) plane -> writes the (9*C, H*W) im2col matrix to dst_ref."""
        C = a.shape[0]
        for ky in range(3):
            for kx in range(3):
                dy, dx = ky - 1, kx - 1
                off = dy * W + dx                  # flattened tap offset
                # tap[p] = a[p + off] (circular roll on the lane axis / XLU);
                # out-of-image lanes are zeroed by the border mask below.
                tap = a if off == 0 else pltpu.roll(a, shift=(-off) % HW, axis=1)
                mask = None
                if dy == -1:
                    mask = not_top
                elif dy == 1:
                    mask = not_bottom
                if dx == -1:
                    mask = not_left if mask is None else mask * not_left
                elif dx == 1:
                    mask = not_right if mask is None else mask * not_right
                if mask is not None:
                    tap = tap * mask               # sublane-broadcast multiply
                t = ky * 3 + kx
                dst_ref[t * C:(t + 1) * C, :] = tap
        return dst_ref[...]

    x = x_ref[0]                                           # (Cin, H*W)

    # ---- Conv1: one K=9*Cin MXU matmul, bias + ReLU (Dropout eval = identity) ----
    p1 = im2col(x, p1_ref)                                 # (9*Cin, H*W)
    h1 = jnp.dot(w1_ref[...], p1, preferred_element_type=jnp.float32)
    h1 = jnp.maximum(h1 + b1_ref[...], 0.0)

    # ---- Conv2: one K=9*Cmid MXU matmul, bias + ReLU (Dropout eval = identity) ----
    p2 = im2col(h1, p2_ref)                                # (9*Cmid, H*W)
    h2 = jnp.dot(w2_ref[...], p2, preferred_element_type=jnp.float32)
    h2 = jnp.maximum(h2 + b2_ref[...], 0.0)

    o_ref[0] = h2.astype(o_ref.dtype)


@jax.jit
def double_conv(x_nchw, w1, b1, w2, b2):
    """x_nchw: (N, Cin, H, W); w*: PyTorch (Cout, Cin, 3, 3); b*: (C,). NCHW out."""
    N, Cin, H, W = x_nchw.shape
    Cmid = w1.shape[0]
    Cout = w2.shape[0]
    HW = H * W

    # NCHW -> (N, C, H*W) is a free view: no transpose / pad HBM round-trips.
    x = x_nchw.reshape(N, Cin, HW).astype(jnp.float32)
    # (Cout, Cin, kh, kw) -> (Cout, kh, kw, Cin) -> (Cout, 9*Cin): tap-major,
    # channel-minor — matches the im2col row order built in the kernel.
    w1m = jnp.transpose(w1, (0, 2, 3, 1)).reshape(Cmid, 9 * Cin).astype(jnp.float32)
    w2m = jnp.transpose(w2, (0, 2, 3, 1)).reshape(Cout, 9 * Cmid).astype(jnp.float32)
    b1c = b1.reshape(Cmid, 1).astype(jnp.float32)
    b2c = b2.reshape(Cout, 1).astype(jnp.float32)

    flops = 2 * N * HW * 9 * (Cin * Cmid + Cmid * Cout)
    bytes_accessed = 4 * (x.size + w1m.size + w2m.size + b1c.size + b2c.size
                          + N * Cout * HW)

    out = pl.pallas_call(
        functools.partial(_double_conv_kernel, H=H, W=W),
        out_shape=jax.ShapeDtypeStruct((N, Cout, HW), jnp.float32),
        grid_spec=pltpu.PrefetchScalarGridSpec(
            num_scalar_prefetch=0,
            grid=(N,),                 # one image per step; 'parallel' -> v7x 2 TCs
            in_specs=[
                pl.BlockSpec((1, Cin, HW), lambda n: (n, 0, 0)),
                pl.BlockSpec((Cmid, 9 * Cin), lambda n: (0, 0)),
                pl.BlockSpec((Cmid, 1), lambda n: (0, 0)),
                pl.BlockSpec((Cout, 9 * Cmid), lambda n: (0, 0)),
                pl.BlockSpec((Cout, 1), lambda n: (0, 0)),
            ],
            out_specs=pl.BlockSpec((1, Cout, HW), lambda n: (n, 0, 0)),
            scratch_shapes=[
                pltpu.VMEM((9 * Cin, HW), jnp.float32),
                pltpu.VMEM((9 * Cmid, HW), jnp.float32),
            ],
        ),
        compiler_params=pltpu.CompilerParams(
            dimension_semantics=("parallel",)),
        cost_estimate=pl.CostEstimate(
            flops=flops, transcendentals=0, bytes_accessed=bytes_accessed),
    )(x, w1m, b1c, w2m, b2c)

    return out.reshape(N, Cout, H, W)    # free view back to NCHW


def _reference(x_nchw, w1, b1, w2, b2):
    """Pure-JAX reference (lax conv) for correctness check."""
    dn = lax.conv_dimension_numbers(x_nchw.shape, w1.shape,
                                    ("NCHW", "OIHW", "NCHW"))
    y = lax.conv_general_dilated(x_nchw, w1, (1, 1), ((1, 1), (1, 1)),
                                 dimension_numbers=dn)
    y = jnp.maximum(y + b1[None, :, None, None], 0.0)
    y = lax.conv_general_dilated(y, w2, (1, 1), ((1, 1), (1, 1)),
                                 dimension_numbers=dn)
    y = jnp.maximum(y + b2[None, :, None, None], 0.0)
    return y


if __name__ == "__main__":
    # DoubleConv(in_channels=4, out_channels=8) at small shapes.
    N, Cin, Cmid, Cout, H, W = 2, 4, 8, 8, 16, 16

    key = jax.random.PRNGKey(0)
    kx, k1, kb1, k2, kb2 = jax.random.split(key, 5)
    x = jax.random.normal(kx, (N, Cin, H, W), jnp.float32)
    w1 = jax.random.normal(k1, (Cmid, Cin, 3, 3), jnp.float32) * 0.1
    b1 = jax.random.normal(kb1, (Cmid,), jnp.float32) * 0.1
    w2 = jax.random.normal(k2, (Cout, Cmid, 3, 3), jnp.float32) * 0.1
    b2 = jax.random.normal(kb2, (Cout,), jnp.float32) * 0.1

    out = jax.block_until_ready(double_conv(x, w1, b1, w2, b2))

    ref = _reference(x, w1, b1, w2, b2)
    assert out.shape == (N, Cout, H, W), out.shape
    max_err = float(jnp.max(jnp.abs(out - ref)))
    assert jnp.allclose(out, ref, atol=1e-4, rtol=1e-4), max_err

    print("KERNEL_OK")
</pallas_src>

<mosaic_0001>
module attributes {stable_mosaic.version = 11 : i64} {
  func.func @_double_conv_kernel(%arg0: i32, %arg1: memref<1x4x256xf32, #tpu.memory_space<vmem>>, %arg2: memref<8x36xf32, #tpu.memory_space<vmem>>, %arg3: memref<8x1xf32, #tpu.memory_space<vmem>>, %arg4: memref<8x72xf32, #tpu.memory_space<vmem>>, %arg5: memref<8x1xf32, #tpu.memory_space<vmem>>, %arg6: memref<1x8x256xf32, #tpu.memory_space<vmem>>, %arg7: memref<36x256xf32, #tpu.memory_space<vmem>>, %arg8: memref<72x256xf32, #tpu.memory_space<vmem>>) attributes {dimension_semantics = [#tpu.dimension_semantics<parallel>], iteration_bounds = array<i64: 2>, scalar_prefetch = 0 : i64, scratch_operands = 2 : i64, tpu.core_type = #tpu.core_type<tc>, window_params = [{transform_indices = @transform_0, window_bounds = array<i64: 1, 4, 256>}, {pipeline_mode = #tpu.pipeline_mode<synchronous>, transform_indices = @transform_1, window_bounds = array<i64: 8, 36>}, {pipeline_mode = #tpu.pipeline_mode<synchronous>, transform_indices = @transform_2, window_bounds = array<i64: 8, 1>}, {pipeline_mode = #tpu.pipeline_mode<synchronous>, transform_indices = @transform_3, window_bounds = array<i64: 8, 72>}, {pipeline_mode = #tpu.pipeline_mode<synchronous>, transform_indices = @transform_4, window_bounds = array<i64: 8, 1>}, {transform_indices = @transform_5, window_bounds = array<i64: 1, 8, 256>}]} {
    %0 = tpu.iota {dimensions = array<i32: 1>} : vector<1x256xi32>
    %c15_i32 = arith.constant 15 : i32
    %1 = vector.broadcast %c15_i32 : i32 to vector<1x256xi32>
    %2 = arith.andi %0, %1 : vector<1x256xi32>
    %c16_i32 = arith.constant 16 : i32
    %3 = vector.broadcast %c16_i32 : i32 to vector<1x256xi32>
    %4 = arith.cmpi sge, %0, %3 : vector<1x256xi32>
    %5 = arith.extui %4 : vector<1x256xi1> to vector<1x256xi32>
    %6 = arith.sitofp %5 : vector<1x256xi32> to vector<1x256xf32>
    %c240_i32 = arith.constant 240 : i32
    %7 = vector.broadcast %c240_i32 : i32 to vector<1x256xi32>
    %8 = arith.cmpi slt, %0, %7 : vector<1x256xi32>
    %9 = arith.extui %8 : vector<1x256xi1> to vector<1x256xi32>
    %10 = arith.sitofp %9 : vector<1x256xi32> to vector<1x256xf32>
    %c1_i32 = arith.constant 1 : i32
    %11 = vector.broadcast %c1_i32 : i32 to vector<1x256xi32>
    %12 = arith.cmpi sge, %2, %11 : vector<1x256xi32>
    %13 = arith.extui %12 : vector<1x256xi1> to vector<1x256xi32>
    %14 = arith.sitofp %13 : vector<1x256xi32> to vector<1x256xf32>
    %c15_i32_0 = arith.constant 15 : i32
    %15 = vector.broadcast %c15_i32_0 : i32 to vector<1x256xi32>
    %16 = arith.cmpi slt, %2, %15 : vector<1x256xi32>
    %17 = arith.extui %16 : vector<1x256xi1> to vector<1x256xi32>
    %18 = arith.sitofp %17 : vector<1x256xi32> to vector<1x256xf32>
    %c0 = arith.constant 0 : index
    %c0_1 = arith.constant 0 : index
    %c0_2 = arith.constant 0 : index
    %19 = vector.load %arg1[%c0, %c0_1, %c0_2] : memref<1x4x256xf32, #tpu.memory_space<vmem>>, vector<1x4x256xf32>
    %20 = vector.shape_cast %19 : vector<1x4x256xf32> to vector<4x256xf32>
    %c17_i32 = arith.constant 17 : i32
    %21 = tpu.dynamic_rotate %20 by %c17_i32 dim 1 : vector<4x256xf32>, i32 -> vector<4x256xf32>
    %22 = arith.mulf %6, %14 : vector<1x256xf32>
    %23 = vector.broadcast %22 : vector<1x256xf32> to vector<4x256xf32>
    %24 = arith.mulf %21, %23 : vector<4x256xf32>
    %c0_3 = arith.constant 0 : index
    %c0_4 = arith.constant 0 : index
    %25 = vector.load %arg7[%c0_3, %c0_4] : memref<36x256xf32, #tpu.memory_space<vmem>>, vector<4x256xf32>
    tpu.vector_store %arg7[%c0_3, %c0_4], %24 {strides = array<i32>} : memref<36x256xf32, #tpu.memory_space<vmem>>, vector<4x256xf32>,
    %c16_i32_5 = arith.constant 16 : i32
    %26 = tpu.dynamic_rotate %20 by %c16_i32_5 dim 1 : vector<4x256xf32>, i32 -> vector<4x256xf32>
    %27 = vector.broadcast %6 : vector<1x256xf32> to vector<4x256xf32>
    %28 = arith.mulf %26, %27 : vector<4x256xf32>
    %c4 = arith.constant 4 : index
    %c0_6 = arith.constant 0 : index
    %29 = vector.load %arg7[%c4, %c0_6] : memref<36x256xf32, #tpu.memory_space<vmem>>, vector<4x256xf32>
    tpu.vector_store %arg7[%c4, %c0_6], %28 {strides = array<i32>} : memref<36x256xf32, #tpu.memory_space<vmem>>, vector<4x256xf32>,
    %c15_i32_7 = arith.constant 15 : i32
    %30 = tpu.dynamic_rotate %20 by %c15_i32_7 dim 1 : vector<4x256xf32>, i32 -> vector<4x256xf32>
    %31 = arith.mulf %6, %18 : vector<1x256xf32>
    %32 = vector.broadcast %31 : vector<1x256xf32> to vector<4x256xf32>
    %33 = arith.mulf %30, %32 : vector<4x256xf32>
    %c8 = arith.constant 8 : index
    %c0_8 = arith.constant 0 : index
    %34 = vector.load %arg7[%c8, %c0_8] : memref<36x256xf32, #tpu.memory_space<vmem>>, vector<4x256xf32>
    tpu.vector_store %arg7[%c8, %c0_8], %33 {strides = array<i32>} : memref<36x256xf32, #tpu.memory_space<vmem>>, vector<4x256xf32>,
    %c1_i32_9 = arith.constant 1 : i32
    %35 = tpu.dynamic_rotate %20 by %c1_i32_9 dim 1 : vector<4x256xf32>, i32 -> vector<4x256xf32>
    %36 = vector.broadcast %14 : vector<1x256xf32> to vector<4x256xf32>
    %37 = arith.mulf %35, %36 : vector<4x256xf32>
    %c12 = arith.constant 12 : index
    %c0_10 = arith.constant 0 : index
    %38 = vector.load %arg7[%c12, %c0_10] : memref<36x256xf32, #tpu.memory_space<vmem>>, vector<4x256xf32>
    tpu.vector_store %arg7[%c12, %c0_10], %37 {strides = array<i32>} : memref<36x256xf32, #tpu.memory_space<vmem>>, vector<4x256xf32>,
    %c16 = arith.constant 16 : index
    %c0_11 = arith.constant 0 : index
    %39 = vector.load %arg7[%c16, %c0_11] : memref<36x256xf32, #tpu.memory_space<vmem>>, vector<4x256xf32>
    tpu.vector_store %arg7[%c16, %c0_11], %20 {strides = array<i32>} : memref<36x256xf32, #tpu.memory_space<vmem>>, vector<4x256xf32>,
    %c255_i32 = arith.constant 255 : i32
    %40 = tpu.dynamic_rotate %20 by %c255_i32 dim 1 : vector<4x256xf32>, i32 -> vector<4x256xf32>
    %41 = vector.broadcast %18 : vector<1x256xf32> to vector<4x256xf32>
    %42 = arith.mulf %40, %41 : vector<4x256xf32>
    %c20 = arith.constant 20 : index
    %c0_12 = arith.constant 0 : index
    %43 = vector.load %arg7[%c20, %c0_12] : memref<36x256xf32, #tpu.memory_space<vmem>>, vector<4x256xf32>
    tpu.vector_store %arg7[%c20, %c0_12], %42 {strides = array<i32>} : memref<36x256xf32, #tpu.memory_space<vmem>>, vector<4x256xf32>,
    %c241_i32 = arith.constant 241 : i32
    %44 = tpu.dynamic_rotate %20 by %c241_i32 dim 1 : vector<4x256xf32>, i32 -> vector<4x256xf32>
    %45 = arith.mulf %10, %14 : vector<1x256xf32>
    %46 = vector.broadcast %45 : vector<1x256xf32> to vector<4x256xf32>
    %47 = arith.mulf %44, %46 : vector<4x256xf32>
    %c24 = arith.constant 24 : index
    %c0_13 = arith.constant 0 : index
    %48 = vector.load %arg7[%c24, %c0_13] : memref<36x256xf32, #tpu.memory_space<vmem>>, vector<4x256xf32>
    tpu.vector_store %arg7[%c24, %c0_13], %47 {strides = array<i32>} : memref<36x256xf32, #tpu.memory_space<vmem>>, vector<4x256xf32>,
    %c240_i32_14 = arith.constant 240 : i32
    %49 = tpu.dynamic_rotate %20 by %c240_i32_14 dim 1 : vector<4x256xf32>, i32 -> vector<4x256xf32>
    %50 = vector.broadcast %10 : vector<1x256xf32> to vector<4x256xf32>
    %51 = arith.mulf %49, %50 : vector<4x256xf32>
    %c28 = arith.constant 28 : index
    %c0_15 = arith.constant 0 : index
    %52 = vector.load %arg7[%c28, %c0_15] : memref<36x256xf32, #tpu.memory_space<vmem>>, vector<4x256xf32>
    tpu.vector_store %arg7[%c28, %c0_15], %51 {strides = array<i32>} : memref<36x256xf32, #tpu.memory_space<vmem>>, vector<4x256xf32>,
    %c239_i32 = arith.constant 239 : i32
    %53 = tpu.dynamic_rotate %20 by %c239_i32 dim 1 : vector<4x256xf32>, i32 -> vector<4x256xf32>
    %54 = arith.mulf %10, %18 : vector<1x256xf32>
    %55 = vector.broadcast %54 : vector<1x256xf32> to vector<4x256xf32>
    %56 = arith.mulf %53, %55 : vector<4x256xf32>
    %c32 = arith.constant 32 : index
    %c0_16 = arith.constant 0 : index
    %57 = vector.load %arg7[%c32, %c0_16] : memref<36x256xf32, #tpu.memory_space<vmem>>, vector<4x256xf32>
    tpu.vector_store %arg7[%c32, %c0_16], %56 {strides = array<i32>} : memref<36x256xf32, #tpu.memory_space<vmem>>, vector<4x256xf32>,
    %c0_17 = arith.constant 0 : index
    %c0_18 = arith.constant 0 : index
    %58 = vector.load %arg7[%c0_17, %c0_18] : memref<36x256xf32, #tpu.memory_space<vmem>>, vector<36x256xf32>
    %c0_19 = arith.constant 0 : index
    %c0_20 = arith.constant 0 : index
    %59 = vector.load %arg2[%c0_19, %c0_20] : memref<8x36xf32, #tpu.memory_space<vmem>>, vector<8x36xf32>
    %cst = arith.constant dense<0.000000e+00> : vector<8x256xf32>
    %60 = tpu.matmul %59, %58, %cst {dimension_numbers = #tpu.dot_dimension_numbers<[1], [0], [0], [1], [0, 0, 1, 1], [], []>} : vector<8x36xf32>, vector<36x256xf32>, vector<8x256xf32> -> vector<8x256xf32>
    %c0_21 = arith.constant 0 : index
    %c0_22 = arith.constant 0 : index
    %61 = vector.load %arg3[%c0_21, %c0_22] : memref<8x1xf32, #tpu.memory_space<vmem>>, vector<8x1xf32>
    %62 = vector.broadcast %61 : vector<8x1xf32> to vector<8x256xf32>
    %63 = arith.addf %60, %62 : vector<8x256xf32>
    %cst_23 = arith.constant 0.000000e+00 : f32
    %64 = vector.broadcast %cst_23 : f32 to vector<8x256xf32>
    %65 = arith.maximumf %63, %64 : vector<8x256xf32>
    %c17_i32_24 = arith.constant 17 : i32
    %66 = tpu.dynamic_rotate %65 by %c17_i32_24 dim 1 : vector<8x256xf32>, i32 -> vector<8x256xf32>
    %67 = arith.mulf %6, %14 : vector<1x256xf32>
    %68 = vector.broadcast %67 : vector<1x256xf32> to vector<8x256xf32>
    %69 = arith.mulf %66, %68 : vector<8x256xf32>
    %c0_25 = arith.constant 0 : index
    %c0_26 = arith.constant 0 : index
    %70 = vector.load %arg8[%c0_25, %c0_26] : memref<72x256xf32, #tpu.memory_space<vmem>>, vector<8x256xf32>
    tpu.vector_store %arg8[%c0_25, %c0_26], %69 {strides = array<i32>} : memref<72x256xf32, #tpu.memory_space<vmem>>, vector<8x256xf32>,
    %c16_i32_27 = arith.constant 16 : i32
    %71 = tpu.dynamic_rotate %65 by %c16_i32_27 dim 1 : vector<8x256xf32>, i32 -> vector<8x256xf32>
    %72 = vector.broadcast %6 : vector<1x256xf32> to vector<8x256xf32>
    %73 = arith.mulf %71, %72 : vector<8x256xf32>
    %c8_28 = arith.constant 8 : index
    %c0_29 = arith.constant 0 : index
    %74 = vector.load %arg8[%c8_28, %c0_29] : memref<72x256xf32, #tpu.memory_space<vmem>>, vector<8x256xf32>
    tpu.vector_store %arg8[%c8_28, %c0_29], %73 {strides = array<i32>} : memref<72x256xf32, #tpu.memory_space<vmem>>, vector<8x256xf32>,
    %c15_i32_30 = arith.constant 15 : i32
    %75 = tpu.dynamic_rotate %65 by %c15_i32_30 dim 1 : vector<8x256xf32>, i32 -> vector<8x256xf32>
    %76 = arith.mulf %6, %18 : vector<1x256xf32>
    %77 = vector.broadcast %76 : vector<1x256xf32> to vector<8x256xf32>
    %78 = arith.mulf %75, %77 : vector<8x256xf32>
    %c16_31 = arith.constant 16 : index
    %c0_32 = arith.constant 0 : index
    %79 = vector.load %arg8[%c16_31, %c0_32] : memref<72x256xf32, #tpu.memory_space<vmem>>, vector<8x256xf32>
    tpu.vector_store %arg8[%c16_31, %c0_32], %78 {strides = array<i32>} : memref<72x256xf32, #tpu.memory_space<vmem>>, vector<8x256xf32>,
    %c1_i32_33 = arith.constant 1 : i32
    %80 = tpu.dynamic_rotate %65 by %c1_i32_33 dim 1 : vector<8x256xf32>, i32 -> vector<8x256xf32>
    %81 = vector.broadcast %14 : vector<1x256xf32> to vector<8x256xf32>
    %82 = arith.mulf %80, %81 : vector<8x256xf32>
    %c24_34 = arith.constant 24 : index
    %c0_35 = arith.constant 0 : index
    %83 = vector.load %arg8[%c24_34, %c0_35] : memref<72x256xf32, #tpu.memory_space<vmem>>, vector<8x256xf32>
    tpu.vector_store %arg8[%c24_34, %c0_35], %82 {strides = array<i32>} : memref<72x256xf32, #tpu.memory_space<vmem>>, vector<8x256xf32>,
    %c32_36 = arith.constant 32 : index
    %c0_37 = arith.constant 0 : index
    %84 = vector.load %arg8[%c32_36, %c0_37] : memref<72x256xf32, #tpu.memory_space<vmem>>, vector<8x256xf32>
    tpu.vector_store %arg8[%c32_36, %c0_37], %65 {strides = array<i32>} : memref<72x256xf32, #tpu.memory_space<vmem>>, vector<8x256xf32>,
    %c255_i32_38 = arith.constant 255 : i32
    %85 = tpu.dynamic_rotate %65 by %c255_i32_38 dim 1 : vector<8x256xf32>, i32 -> vector<8x256xf32>
    %86 = vector.broadcast %18 : vector<1x256xf32> to vector<8x256xf32>
    %87 = arith.mulf %85, %86 : vector<8x256xf32>
    %c40 = arith.constant 40 : index
    %c0_39 = arith.constant 0 : index
    %88 = vector.load %arg8[%c40, %c0_39] : memref<72x256xf32, #tpu.memory_space<vmem>>, vector<8x256xf32>
    tpu.vector_store %arg8[%c40, %c0_39], %87 {strides = array<i32>} : memref<72x256xf32, #tpu.memory_space<vmem>>, vector<8x256xf32>,
    %c241_i32_40 = arith.constant 241 : i32
    %89 = tpu.dynamic_rotate %65 by %c241_i32_40 dim 1 : vector<8x256xf32>, i32 -> vector<8x256xf32>
    %90 = arith.mulf %10, %14 : vector<1x256xf32>
    %91 = vector.broadcast %90 : vector<1x256xf32> to vector<8x256xf32>
    %92 = arith.mulf %89, %91 : vector<8x256xf32>
    %c48 = arith.constant 48 : index
    %c0_41 = arith.constant 0 : index
    %93 = vector.load %arg8[%c48, %c0_41] : memref<72x256xf32, #tpu.memory_space<vmem>>, vector<8x256xf32>
    tpu.vector_store %arg8[%c48, %c0_41], %92 {strides = array<i32>} : memref<72x256xf32, #tpu.memory_space<vmem>>, vector<8x256xf32>,
    %c240_i32_42 = arith.constant 240 : i32
    %94 = tpu.dynamic_rotate %65 by %c240_i32_42 dim 1 : vector<8x256xf32>, i32 -> vector<8x256xf32>
    %95 = vector.broadcast %10 : vector<1x256xf32> to vector<8x256xf32>
    %96 = arith.mulf %94, %95 : vector<8x256xf32>
    %c56 = arith.constant 56 : index
    %c0_43 = arith.constant 0 : index
    %97 = vector.load %arg8[%c56, %c0_43] : memref<72x256xf32, #tpu.memory_space<vmem>>, vector<8x256xf32>
    tpu.vector_store %arg8[%c56, %c0_43], %96 {strides = array<i32>} : memref<72x256xf32, #tpu.memory_space<vmem>>, vector<8x256xf32>,
    %c239_i32_44 = arith.constant 239 : i32
    %98 = tpu.dynamic_rotate %65 by %c239_i32_44 dim 1 : vector<8x256xf32>, i32 -> vector<8x256xf32>
    %99 = arith.mulf %10, %18 : vector<1x256xf32>
    %100 = vector.broadcast %99 : vector<1x256xf32> to vector<8x256xf32>
    %101 = arith.mulf %98, %100 : vector<8x256xf32>
    %c64 = arith.constant 64 : index
    %c0_45 = arith.constant 0 : index
    %102 = vector.load %arg8[%c64, %c0_45] : memref<72x256xf32, #tpu.memory_space<vmem>>, vector<8x256xf32>
    tpu.vector_store %arg8[%c64, %c0_45], %101 {strides = array<i32>} : memref<72x256xf32, #tpu.memory_space<vmem>>, vector<8x256xf32>,
    %c0_46 = arith.constant 0 : index
    %c0_47 = arith.constant 0 : index
    %103 = vector.load %arg8[%c0_46, %c0_47] : memref<72x256xf32, #tpu.memory_space<vmem>>, vector<72x256xf32>
    %c0_48 = arith.constant 0 : index
    %c0_49 = arith.constant 0 : index
    %104 = vector.load %arg4[%c0_48, %c0_49] : memref<8x72xf32, #tpu.memory_space<vmem>>, vector<8x72xf32>
    %cst_50 = arith.constant dense<0.000000e+00> : vector<8x256xf32>
    %105 = tpu.matmul %104, %103, %cst_50 {dimension_numbers = #tpu.dot_dimension_numbers<[1], [0], [0], [1], [0, 0, 1, 1], [], []>} : vector<8x72xf32>, vector<72x256xf32>, vector<8x256xf32> -> vector<8x256xf32>
    %c0_51 = arith.constant 0 : index
    %c0_52 = arith.constant 0 : index
    %106 = vector.load %arg5[%c0_51, %c0_52] : memref<8x1xf32, #tpu.memory_space<vmem>>, vector<8x1xf32>
    %107 = vector.broadcast %106 : vector<8x1xf32> to vector<8x256xf32>
    %108 = arith.addf %105, %107 : vector<8x256xf32>
    %cst_53 = arith.constant 0.000000e+00 : f32
    %109 = vector.broadcast %cst_53 : f32 to vector<8x256xf32>
    %110 = arith.maximumf %108, %109 : vector<8x256xf32>
    %c0_54 = arith.constant 0 : index
    %c0_55 = arith.constant 0 : index
    %c0_56 = arith.constant 0 : index
    %111 = vector.load %arg6[%c0_54, %c0_55, %c0_56] : memref<1x8x256xf32, #tpu.memory_space<vmem>>, vector<1x8x256xf32>
    %112 = vector.shape_cast %111 : vector<1x8x256xf32> to vector<8x256xf32>
    %113 = vector.shape_cast %110 : vector<8x256xf32> to vector<1x8x256xf32>
    tpu.vector_store %arg6[%c0_54, %c0_55, %c0_56], %113 {strides = array<i32>} : memref<1x8x256xf32, #tpu.memory_space<vmem>>, vector<1x8x256xf32>,
    return
  }
  func.func @transform_0(%arg0: i32) -> (i32, i32, i32) {
    %c0_i32 = arith.constant 0 : i32
    %c0_i32_0 = arith.constant 0 : i32
    %c0_i32_1 = arith.constant 0 : i32
    return %arg0, %c0_i32, %c0_i32_0 : i32, i32, i32
  }
  func.func @transform_1(%arg0: i32) -> (i32, i32) {
    %c0_i32 = arith.constant 0 : i32
    %c0_i32_0 = arith.constant 0 : i32
    %c0_i32_1 = arith.constant 0 : i32
    return %c0_i32, %c0_i32_0 : i32, i32
  }
  func.func @transform_2(%arg0: i32) -> (i32, i32) {
    %c0_i32 = arith.constant 0 : i32
    %c0_i32_0 = arith.constant 0 : i32
    %c0_i32_1 = arith.constant 0 : i32
    return %c0_i32, %c0_i32_0 : i32, i32
  }
  func.func @transform_3(%arg0: i32) -> (i32, i32) {
    %c0_i32 = arith.constant 0 : i32
    %c0_i32_0 = arith.constant 0 : i32
    %c0_i32_1 = arith.constant 0 : i32
    return %c0_i32, %c0_i32_0 : i32, i32
  }
  func.func @transform_4(%arg0: i32) -> (i32, i32) {
    %c0_i32 = arith.constant 0 : i32
    %c0_i32_0 = arith.constant 0 : i32
    %c0_i32_1 = arith.constant 0 : i32
    return %c0_i32, %c0_i32_0 : i32, i32
  }
  func.func @transform_5(%arg0: i32) -> (i32, i32, i32) {
    %c0_i32 = arith.constant 0 : i32
    %c0_i32_0 = arith.constant 0 : i32
    %c0_i32_1 = arith.constant 0 : i32
    return %arg0, %c0_i32, %c0_i32_0 : i32, i32, i32
  }
}

</mosaic_0001>

<llo_original>
// kernel: double_conv.1
$region0: #{double_conv.1}
  #allocation0 [shape = 'u32[]', space=smem, size = 0x4, offset = 0x4, fixed_abs, tag = 'smem constant byte address 0x4 - core index']
  #allocation1 [shape = 'u32[144,128]{1,0:T(1,128)}', space=vmem, size = 0x12000, scoped, tag = 'internal scratch']
  #allocation2 [shape = 'f32[36,256]{1,0:T(8,128)}', space=vmem, size = 0xa000, scoped, tag = 'scratch operand']
  #allocation3 [shape = 'f32[72,256]{1,0:T(8,128)}', space=vmem, size = 0x12000, scoped, tag = 'scratch operand']
  %s0 = inlined_call_operand.vmem [shape: f32[2,4,256], index: 0, kind: input, shape index: {}]
  %s1 = inlined_call_operand.vmem [shape: f32[8,36], index: 1, kind: input, shape index: {}]
  %s2 = inlined_call_operand.vmem [shape: f32[8,1], index: 2, kind: input, shape index: {}]
  %s3 = inlined_call_operand.vmem [shape: f32[8,72], index: 3, kind: input, shape index: {}]
  %s4 = inlined_call_operand.vmem [shape: f32[8,1], index: 4, kind: input, shape index: {}]
  %s5 = inlined_call_operand.vmem [shape: f32[2,8,256], index: 5, kind: output, shape index: {}]
  %s6 = sld [smem:[#allocation0]]
  $region53: #{double_conv.1} parent=0
    _
  %s8 = ssub.s32 1, %s6
  %s9 = scalar_select 0, %s8, %s6
  loop: start=0, step=1, limit=4
  $region2: #{double_conv.1} parent=0 // loop_pre_header
    _
  $region3: #{double_conv.1} parent=0 // loop_header
    %s11 = sphi 0, %s15
    %p12 = scmp.ge.s32.totalorder %s11, 4
    %s21 = sphi 0, %s23
    %s24 = sphi 0, %s21
    %s25 = sphi 0, %s24
    %s41 = sphi 0, %s25
    %s45 = sphi 0, %s45
    %s47 = sphi 0, %s45
    %s48 = sphi 0, %s47
    %s62 = sphi 0, %s48
    %s66 = sphi 0, %s66
    %s68 = sphi 0, %s66
    %s69 = sphi 0, %s68
    %s83 = sphi 0, %s69
    %s87 = sphi 0, %s87
    %s89 = sphi 0, %s87
    %s90 = sphi 0, %s89
    %s104 = sphi 0, %s90
    %s108 = sphi 0, %s108
    %s110 = sphi 0, %s108
    %s111 = sphi 0, %s110
    %s125 = sphi 0, %s111
    %s131 = sphi 0, %s133
    %s134 = sphi 0, %s131
    %s135 = sphi 0, %s134
    %s151 = sphi 0, %s135
  $region4: #{double_conv.1} parent=0 // loop_header_branch
    %14 = sbr.rel (%p12) target = $region8
  $region5: #{double_conv.1} parent=0 // loop_body
    %s16 = ssub.s32 %s11, 1
    %s17 = ssub.s32 %s11, 2
    %s18 = sadd.s32 %s11, 1
    %s19 = ssub.s32 %s11, %s18
    %p20 = scmp.eq.s32.totalorder %s19, 0
    %s22 = sadd.s32 %s21, 1
    %s23 = scalar_select %p20, %s21, %s22
    %p26 = pneg %p20
    %p27 = scmp.eq.s32.totalorder %s11, 1
    %p28 = por %p26, %p27
    %p29 = scmp.ne.s32.totalorder %s21, %s24
    %p30 = scmp.eq.s32.totalorder %s11, 0
    %p31 = por %p29, %p30
    %p32 = scmp.ne.s32.totalorder %s21, %s24
    %p33 = scmp.eq.s32.totalorder %s16, 1
    %p34 = por %p32, %p33
    %p35 = scmp.ne.s32.totalorder %s24, %s25
    %p36 = scmp.eq.s32.totalorder %s16, 0
    %p37 = por %p35, %p36
    %p38 = scmp.ne.s32.totalorder %s24, %s25
    %p39 = scmp.eq.s32.totalorder %s17, 1
    %p40 = por %p38, %p39
    %p42 = scmp.ne.s32.totalorder %s25, %s41
    %p43 = scmp.eq.s32.totalorder %s17, 0
    %p44 = por %p42, %p43
    %s46 = sadd.s32 %s45, 1
    %p49 = scmp.eq.s32.totalorder %s11, 1
    %p50 = scmp.ne.s32.totalorder %s45, %s47
    %p51 = scmp.eq.s32.totalorder %s11, 0
    %p52 = por %p50, %p51
    %p53 = scmp.ne.s32.totalorder %s45, %s47
    %p54 = scmp.eq.s32.totalorder %s16, 1
    %p55 = por %p53, %p54
    %p56 = scmp.ne.s32.totalorder %s47, %s48
    %p57 = scmp.eq.s32.totalorder %s16, 0
    %p58 = por %p56, %p57
    %p59 = scmp.ne.s32.totalorder %s47, %s48
    %p60 = scmp.eq.s32.totalorder %s17, 1
    %p61 = por %p59, %p60
    %p63 = scmp.ne.s32.totalorder %s48, %s62
    %p64 = scmp.eq.s32.totalorder %s17, 0
    %p65 = por %p63, %p64
    %s67 = sadd.s32 %s66, 1
    %p70 = scmp.eq.s32.totalorder %s11, 1
    %p71 = scmp.ne.s32.totalorder %s66, %s68
    %p72 = scmp.eq.s32.totalorder %s11, 0
    %p73 = por %p71, %p72
    %p74 = scmp.ne.s32.totalorder %s66, %s68
    %p75 = scmp.eq.s32.totalorder %s16, 1
    %p76 = por %p74, %p75
    %p77 = scmp.ne.s32.totalorder %s68, %s69
    %p78 = scmp.eq.s32.totalorder %s16, 0
    %p79 = por %p77, %p78
    %p80 = scmp.ne.s32.totalorder %s68, %s69
    %p81 = scmp.eq.s32.totalorder %s17, 1
    %p82 = por %p80, %p81
    %p84 = scmp.ne.s32.totalorder %s69, %s83
    %p85 = scmp.eq.s32.totalorder %s17, 0
    %p86 = por %p84, %p85
    %s88 = sadd.s32 %s87, 1
    %p91 = scmp.eq.s32.totalorder %s11, 1
    %p92 = scmp.ne.s32.totalorder %s87, %s89
    %p93 = scmp.eq.s32.totalorder %s11, 0
    %p94 = por %p92, %p93
    %p95 = scmp.ne.s32.totalorder %s87, %s89
    %p96 = scmp.eq.s32.totalorder %s16, 1
    %p97 = por %p95, %p96
    %p98 = scmp.ne.s32.totalorder %s89, %s90
    %p99 = scmp.eq.s32.totalorder %s16, 0
    %p100 = por %p98, %p99
    %p101 = scmp.ne.s32.totalorder %s89, %s90
    %p102 = scmp.eq.s32.totalorder %s17, 1
    %p103 = por %p101, %p102
    %p105 = scmp.ne.s32.totalorder %s90, %s104
    %p106 = scmp.eq.s32.totalorder %s17, 0
    %p107 = por %p105, %p106
    %s109 = sadd.s32 %s108, 1
    %p112 = scmp.eq.s32.totalorder %s11, 1
    %p113 = scmp.ne.s32.totalorder %s108, %s110
    %p114 = scmp.eq.s32.totalorder %s11, 0
    %p115 = por %p113, %p114
    %p116 = scmp.ne.s32.totalorder %s108, %s110
    %p117 = scmp.eq.s32.totalorder %s16, 1
    %p118 = por %p116, %p117
    %p119 = scmp.ne.s32.totalorder %s110, %s111
    %p120 = scmp.eq.s32.totalorder %s16, 0
    %p121 = por %p119, %p120
    %p122 = scmp.ne.s32.totalorder %s110, %s111
    %p123 = scmp.eq.s32.totalorder %s17, 1
    %p124 = por %p122, %p123
    %p126 = scmp.ne.s32.totalorder %s111, %s125
    %p127 = scmp.eq.s32.totalorder %s17, 0
    %p128 = por %p126, %p127
    %s129 = ssub.s32 %s11, %s18
    %p130 = scmp.eq.s32.totalorder %s129, 0
    %s132 = sadd.s32 %s131, 1
    %s133 = scalar_select %p130, %s131, %s132
    %p136 = pneg %p130
    %p137 = scmp.eq.s32.totalorder %s11, 1
    %p138 = por %p136, %p137
    %p139 = scmp.ne.s32.totalorder %s131, %s134
    %p140 = scmp.eq.s32.totalorder %s11, 0
    %p141 = por %p139, %p140
    %p142 = scmp.ne.s32.totalorder %s131, %s134
    %p143 = scmp.eq.s32.totalorder %s16, 1
    %p144 = por %p142, %p143
    %p145 = scmp.ne.s32.totalorder %s134, %s135
    %p146 = scmp.eq.s32.totalorder %s16, 0
    %p147 = por %p145, %p146
    %p148 = scmp.ne.s32.totalorder %s134, %s135
    %p149 = scmp.eq.s32.totalorder %s17, 1
    %p150 = por %p148, %p149
    %p152 = scmp.ne.s32.totalorder %s135, %s151
    %p153 = scmp.eq.s32.totalorder %s17, 0
    %p154 = por %p152, %p153
    %p155 = scmp.le.s32.totalorder 1, %s11
    %p156 = scmp.lt.s32.totalorder %s11, 3
    %p157 = pnand %p155, %p156
    %p158 = pneg %p157
    // Predicated region
    $region9: #{double_conv.1} parent=5 // pred_check
      _
    $region10: #{double_conv.1} parent=5 // pred_check_branch
      %160 = sbr.rel (%p157) target = $region12
    $region11: #{double_conv.1} parent=5 // pred_region
      %s161 = ssub.s32 %s11, 1
      // Predicated region
      $region13: #{double_conv.1} parent=11 // pred_check
        %p162 = pneg %p58
      $region14: #{double_conv.1} parent=11 // pred_check_branch
        %164 = sbr.rel (%p162) target = $region16
      $region15: #{double_conv.1} parent=11 // pred_region
        _
      $region16: #{double_conv.1} parent=11 // pred_fallthru
        _
      // Predicated region
      $region17: #{double_conv.1} parent=11 // pred_check
        %p165 = pneg %p79
      $region18: #{double_conv.1} parent=11 // pred_check_branch
        %167 = sbr.rel (%p165) target = $region20
      $region19: #{double_conv.1} parent=11 // pred_region
        _
      $region20: #{double_conv.1} parent=11 // pred_fallthru
        _
      // Predicated region
      $region21: #{double_conv.1} parent=11 // pred_check
        %p168 = pneg %p100
      $region22: #{double_conv.1} parent=11 // pred_check_branch
        %170 = sbr.rel (%p168) target = $region24
      $region23: #{double_conv.1} parent=11 // pred_region
        _
      $region24: #{double_conv.1} parent=11 // pred_fallthru
        _
      // Predicated region
      $region25: #{double_conv.1} parent=11 // pred_check
        %p171 = pneg %p121
      $region26: #{double_conv.1} parent=11 // pred_check_branch
        %173 = sbr.rel (%p171) target = $region28
      $region27: #{double_conv.1} parent=11 // pred_region
        _
      $region28: #{double_conv.1} parent=11 // pred_fallthru
        _
    $region12: #{double_conv.1} parent=5 // pred_fallthru
      _
    %p174 = scmp.lt.s32.totalorder %s11, 2
    // Predicated region
    $region29: #{double_conv.1} parent=5 // pred_check
      %p175 = pneg %p174
    $region30: #{double_conv.1} parent=5 // pred_check_branch
      %177 = sbr.rel (%p175) target = $region32
    $region31: #{double_conv.1} parent=5 // pred_region
      // Predicated region
      $region33: #{double_conv.1} parent=31 // pred_check
        %p178 = pneg %p31
      $region34: #{double_conv.1} parent=31 // pred_check_branch
        %180 = sbr.rel (%p178) target = $region36
      $region35: #{double_conv.1} parent=31 // pred_region
        %p181 = scmp.lt.s32.totalorder %s11, 1
        %s182 = scalar_select %p181, %s11, 1
        %s183 = smul.addr %s182, 2
        %s184 = smul.addr %s183, 4
        %s185 = scalar_lea.vmem %s0, %s184
      $region36: #{double_conv.1} parent=31 // pred_fallthru
        _
    $region32: #{double_conv.1} parent=5 // pred_fallthru
      _
    %p186 = scmp.le.s32.totalorder 1, %s11
    %p187 = scmp.lt.s32.totalorder %s11, 3
    %p188 = pnand %p186, %p187
    %p189 = pneg %p188
    // Predicated region
    $region37: #{double_conv.1} parent=5 // pred_check
      _
    $region38: #{double_conv.1} parent=5 // pred_check_branch
      %191 = sbr.rel (%p188) target = $region40
    $region39: #{double_conv.1} parent=5 // pred_region
      %s192 = ssub.s32 %s11, 1
      %p193 = scmp.lt.s32.totalorder %s16, 1
      %s194 = scalar_select %p193, %s16, 1
      %s195 = smul.addr %s194, 2
      %s196 = smul.addr %s195, 4
      %s197 = scalar_lea.vmem %s0, %s196
      %p198 = pneg %p37
      %p199 = pneg %p34
      %p200 = pneg %p58
      %p201 = pneg %p55
      %p202 = pneg %p79
      %p203 = pneg %p76
      %p204 = pneg %p100
      %p205 = pneg %p97
      %p206 = pneg %p121
      %p207 = pneg %p118
      %p208 = pneg %p147
      %p209 = pneg %p144
      %p210 = scmp.lt.s32.totalorder %s16, 1
      %s211 = scalar_select %p210, %s16, 1
      %s212 = smul.addr %s211, 2
      %s213 = smul.addr %s212, 8
      %s214 = scalar_lea.vmem %s5, %s213
      %p215 = scmp.lt.s32.totalorder %s16, 1
      %s216 = scalar_select %p215, %s16, 1
      %s217 = smul.addr %s216, 2
      %s218 = smul.addr %s217, 4
      %s219 = scalar_lea.vmem %s0, %s218
      %p220 = scmp.lt.s32.totalorder %s16, 1
      %s221 = scalar_select %p220, %s16, 1
      %s222 = smul.addr %s221, 2
      %s223 = smul.addr %s222, 8
      %s224 = scalar_lea.vmem %s5, %s223
      %v225 = vlaneseq
      %v226 = vand.u32 %v225, 127
      %v227 = vadd.s32 %v226, 128
      %v228 = vand.u32 %v226, 15
      %v229 = vand.u32 %v227, 15
      %vm230 = vcmp.ge.s32.totalorder %v226, 16
      %vm231 = vcmp.ge.s32.totalorder %v227, 16
      %v232 = vsel %vm230, 1, 0
      %v233 = vsel %vm231, 1, 0
      %v234 = vcvt.s32.f32 %v232
      %v235 = vcvt.s32.f32 %v233
      %vm236 = vcmp.lt.s32.totalorder %v226, 240
      %vm237 = vcmp.lt.s32.totalorder %v227, 240
      %v238 = vsel %vm236, 1, 0
      %v239 = vsel %vm237, 1, 0
      %v240 = vcvt.s32.f32 %v238
      %v241 = vcvt.s32.f32 %v239
      %vm242 = vcmp.ge.s32.totalorder %v228, 1
      %vm243 = vcmp.ge.s32.totalorder %v229, 1
      %v244 = vsel %vm242, 1, 0
      %v245 = vsel %vm243, 1, 0
      %v246 = vcvt.s32.f32 %v244
      %v247 = vcvt.s32.f32 %v245
      %vm248 = vcmp.lt.s32.totalorder %v228, 15
      %vm249 = vcmp.lt.s32.totalorder %v229, 15
      %v250 = vsel %vm248, 1, 0
      %v251 = vsel %vm249, 1, 0
      %v252 = vcvt.s32.f32 %v250
      %v253 = vcvt.s32.f32 %v251
      %v254 = vld [vmem:[%s219] sm:$0xff]
      %v256 = vcombine.high %v254, %v254
      %258 = vrot.lane.b32.xlu0 %v254, 17
      %v259 = vpop.permute.xlu0 %258
      %260 = vrot.lane.b32.xlu0 %v256, 17
      %v261 = vpop.permute.xlu0 %260
      %vm262 = vcmp.lt.s32.totalorder %v226, 17
      %v263 = vsel %vm262, %v259, %v261
      %v264 = vsel %vm262, %v261, %v259
      %v265 = vmul.f32 %v234, %v246
      %v266 = vmul.f32 %v235, %v247
      %v267 = vmul.f32 %v264, %v265
      %v268 = vmul.f32 %v263, %v266
      %269 = vst [vmem:[#allocation2] sm:$0xf] %v267
      %270 = vst [vmem:[#allocation2 + $0x8] sm:$0xf] %v268
      %271 = vrot.lane.b32.xlu0 %v254, 16
      %v272 = vpop.permute.xlu0 %271
      %273 = vrot.lane.b32.xlu0 %v256, 16
      %v274 = vpop.permute.xlu0 %273
      %vm275 = vcmp.lt.s32.totalorder %v226, 16
      %v276 = vsel %vm275, %v272, %v274
      %v277 = vsel %vm275, %v274, %v272
      %v278 = vmul.f32 %v277, %v234
      %v279 = vmul.f32 %v276, %v235
      %v282 = vrot.slane %v278, 4
      %v283 = vrot.slane %v279, 4
      %286 = vst [vmem:[#allocation2] sm:$0xf0] %v282
      %287 = vst [vmem:[#allocation2 + $0x8] sm:$0xf0] %v283
      %288 = vrot.lane.b32.xlu0 %v254, 15
      %v289 = vpop.permute.xlu0 %288
      %290 = vrot.lane.b32.xlu0 %v256, 15
      %v291 = vpop.permute.xlu0 %290
      %vm292 = vcmp.lt.s32.totalorder %v226, 15
      %v293 = vsel %vm292, %v289, %v291
      %v294 = vsel %vm292, %v291, %v289
      %v295 = vmul.f32 %v234, %v252
      %v296 = vmul.f32 %v235, %v253
      %v297 = vmul.f32 %v294, %v295
      %v298 = vmul.f32 %v293, %v296
      %299 = vst [vmem:[#allocation2 + $0x10] sm:$0xf] %v297
      %300 = vst [vmem:[#allocation2 + $0x18] sm:$0xf] %v298
      %301 = vrot.lane.b32.xlu0 %v254, 1
      %v302 = vpop.permute.xlu0 %301
      %303 = vrot.lane.b32.xlu0 %v256, 1
      %v304 = vpop.permute.xlu0 %303
      %vm305 = vcmp.lt.s32.totalorder %v226, 1
      %v306 = vsel %vm305, %v302, %v304
      %v307 = vsel %vm305, %v304, %v302
      %v308 = vmul.f32 %v307, %v246
      %v309 = vmul.f32 %v306, %v247
      %v312 = vrot.slane %v308, 4
      %v313 = vrot.slane %v309, 4
      %316 = vst [vmem:[#allocation2 + $0x10] sm:$0xf0] %v312
      %317 = vst [vmem:[#allocation2 + $0x18] sm:$0xf0] %v313
      %318 = vst [vmem:[#allocation2 + $0x20] sm:$0xf] %v254
      %319 = vst [vmem:[#allocation2 + $0x28] sm:$0xf] %v256
      %320 = vrot.lane.b32.xlu0 %v254, 127
      %v321 = vpop.permute.xlu0 %320
      %322 = vrot.lane.b32.xlu0 %v256, 127
      %v323 = vpop.permute.xlu0 %322
      %vm324 = vcmp.lt.s32.totalorder %v226, 127
      %v325 = vsel %vm324, %v321, %v323
      %v326 = vsel %vm324, %v323, %v321
      %v327 = vmul.f32 %v325, %v252
      %v328 = vmul.f32 %v326, %v253
      %v331 = vrot.slane %v327, 4
      %v332 = vrot.slane %v328, 4
      %335 = vst [vmem:[#allocation2 + $0x20] sm:$0xf0] %v331
      %336 = vst [vmem:[#allocation2 + $0x28] sm:$0xf0] %v332
      %337 = vrot.lane.b32.xlu0 %v254, 113
      %v338 = vpop.permute.xlu0 %337
      %339 = vrot.lane.b32.xlu0 %v256, 113
      %v340 = vpop.permute.xlu0 %339
      %vm341 = vcmp.lt.s32.totalorder %v226, 113
      %v342 = vsel %vm341, %v338, %v340
      %v343 = vsel %vm341, %v340, %v338
      %v344 = vmul.f32 %v240, %v246
      %v345 = vmul.f32 %v241, %v247
      %v346 = vmul.f32 %v342, %v344
      %v347 = vmul.f32 %v343, %v345
      %348 = vst [vmem:[#allocation2 + $0x30] sm:$0xf] %v346
      %349 = vst [vmem:[#allocation2 + $0x38] sm:$0xf] %v347
      %350 = vrot.lane.b32.xlu0 %v254, 112
      %v351 = vpop.permute.xlu0 %350
      %352 = vrot.lane.b32.xlu0 %v256, 112
      %v353 = vpop.permute.xlu0 %352
      %vm354 = vcmp.lt.s32.totalorder %v226, 112
      %v355 = vsel %vm354, %v351, %v353
      %v356 = vsel %vm354, %v353, %v351
      %v357 = vmul.f32 %v355, %v240
      %v358 = vmul.f32 %v356, %v241
      %v361 = vrot.slane %v357, 4
      %v362 = vrot.slane %v358, 4
      %365 = vst [vmem:[#allocation2 + $0x30] sm:$0xf0] %v361
      %366 = vst [vmem:[#allocation2 + $0x38] sm:$0xf0] %v362
      %367 = vrot.lane.b32.xlu0 %v254, 111
      %v368 = vpop.permute.xlu0 %367
      %369 = vrot.lane.b32.xlu0 %v256, 111
      %v370 = vpop.permute.xlu0 %369
      %vm371 = vcmp.lt.s32.totalorder %v226, 111
      %v372 = vsel %vm371, %v368, %v370
      %v373 = vsel %vm371, %v370, %v368
      %v374 = vmul.f32 %v240, %v252
      %v375 = vmul.f32 %v241, %v253
      %v376 = vmul.f32 %v372, %v374
      %v377 = vmul.f32 %v373, %v375
      %378 = vst [vmem:[#allocation2 + $0x40] sm:$0xf] %v376
      %379 = vst [vmem:[#allocation2 + $0x48] sm:$0xf] %v377
      %v380 = vld [vmem:[#allocation2] sm:$0xff]
      %v381 = vld [vmem:[#allocation2 + $0x8] sm:$0xff]
      %v382 = vld [vmem:[#allocation2 + $0x10] sm:$0xff]
      %v383 = vld [vmem:[#allocation2 + $0x18] sm:$0xff]
      %v384 = vld [vmem:[#allocation2 + $0x20] sm:$0xff]
      %v385 = vld [vmem:[#allocation2 + $0x28] sm:$0xff]
      %v386 = vld [vmem:[#allocation2 + $0x30] sm:$0xff]
      %v387 = vld [vmem:[#allocation2 + $0x38] sm:$0xff]
      %v388 = vld [vmem:[#allocation2 + $0x40] sm:$0xf]
      %v389 = vld [vmem:[#allocation2 + $0x48] sm:$0xf]
      %v390 = vld [vmem:[%s1] sm:$0xff]
      %v391 = vld [vmem:[%s2] sm:$0xff]
      %393 = vset.pattern.permute.xlu0 0
      %394 = vperm.xlu0 %393, %v391
      %v395 = vpop.permute.xlu0 %394
      %vm397 = vcmask 293888
      %v399 = vsel %vm397, %v390, 0
      %vm401 = vcmask 1043456
      %v403 = vsel %vm401, %v388, 0
      %v406 = vsel %vm401, %v389, 0
      %408 = vmatprep.subr.mxu0 0.0
      %409 = vmatpush1.msra.mxu0 0.0
      %410 = vmatprep.subr.mxu0 0.0
      %411 = vmatpush1.msra.mxu0 0.0
      %412 = vmatprep.subr.mxu0 0.0
      %413 = vmatpush1.msra.mxu0 0.0
      %414 = vmatprep.subr.mxu0 0.0
      %415 = vmatpush1.msra.mxu0 0.0
      %416 = vmatprep.subr.mxu0 0.0
      %417 = vmatpush1.msra.mxu0 0.0
      %418 = vmatprep.subr.mxu0 0.0
      %419 = vmatpush1.msra.mxu0 0.0
      %420 = vmatprep.subr.mxu0 0.0
      %421 = vmatpush1.msra.mxu0 0.0
      %422 = vmatprep.subr.mxu0 0.0
      %423 = vmatpush1.msra.mxu0 0.0
      %424 = vmatprep.subr.mxu0 0.0
      %425 = vmatpush1.msra.mxu0 0.0
      %426 = vmatprep.subr.mxu0 0.0
      %427 = vmatpush1.msra.mxu0 0.0
      %428 = vmatprep.subr.mxu0 0.0
      %429 = vmatpush1.msra.mxu0 0.0
      %430 = vmatprep.subr.mxu0 %v406
      %431 = vmatpush1.msra.mxu0 %v403
      %432 = vmatprep.subr.mxu0 %v387
      %433 = vmatpush1.msra.mxu0 %v386
      %434 = vmatprep.subr.mxu0 %v385
      %435 = vmatpush1.msra.mxu0 %v384
      %436 = vmatprep.subr.mxu0 %v383
      %437 = vmatpush1.msra.mxu0 %v382
      %438 = vmatprep.subr.mxu0 %v381
      %439 = vmatpush1.msra.mxu0 %v380
      %440 = vmatprep.subr.mxu0 0.0
      %441 = vmatpush2.msra.mxu0 0.0
      %442 = vmatprep.subr.mxu0 0.0
      %443 = vmatpush2.msra.mxu0 0.0
      %444 = vmatprep.subr.mxu0 0.0
      %445 = vmatpush2.msra.mxu0 0.0
      %446 = vmatprep.subr.mxu0 0.0
      %447 = vmatpush2.msra.mxu0 0.0
      %448 = vmatprep.subr.mxu0 0.0
      %449 = vmatpush2.msra.mxu0 0.0
      %450 = vmatprep.subr.mxu0 0.0
      %451 = vmatpush2.msra.mxu0 0.0
      %452 = vmatprep.subr.mxu0 0.0
      %453 = vmatpush2.msra.mxu0 0.0
      %454 = vmatprep.subr.mxu0 0.0
      %455 = vmatpush2.msra.mxu0 0.0
      %456 = vmatprep.subr.mxu0 0.0
      %457 = vmatpush2.msra.mxu0 0.0
      %458 = vmatprep.subr.mxu0 0.0
      %459 = vmatpush2.msra.mxu0 0.0
      %460 = vmatprep.subr.mxu0 0.0
      %461 = vmatpush2.msra.mxu0 0.0
      %462 = vmatprep.subr.mxu0 0.0
      %463 = vmatpush2.msra.mxu0 0.0
      %464 = vmatprep.subr.mxu0 0.0
      %465 = vmatpush2.msra.mxu0 0.0
      %466 = vmatprep.subr.mxu0 0.0
      %467 = vmatpush2.msra.mxu0 0.0
      %468 = vmatprep.subr.mxu0 0.0
      %469 = vmatpush2.msra.mxu0 0.0
      %470 = vmatprep.subr.mxu0 0.0
      %471 = vmatpush2.msra.mxu0 0.0
      %472 = vmatprep.mubr.f32.mxu0 0.0
      %473 = vmatmul.mubr.f32.gmra.mxu0 %v399
      %v474 = vpop.f32.mrf.mxu0
      %v475 = vadd.f32 %v395, %v474
      %v476 = vpop.f32.mrf.mxu0
      %v477 = vadd.f32 %v395, %v476
      %478 = vdwg.mxu0
      %v479 = vmax.f32 %v475, 0.0
      %v480 = vmax.f32 %v477, 0.0
      %481 = vrot.lane.b32.xlu0 %v479, 17
      %v482 = vpop.permute.xlu0 %481
      %483 = vrot.lane.b32.xlu0 %v480, 17
      %v484 = vpop.permute.xlu0 %483
      %v485 = vsel %vm262, %v482, %v484
      %v486 = vsel %vm262, %v484, %v482
      %v487 = vmul.f32 %v486, %v265
      %v488 = vmul.f32 %v485, %v266
      %489 = vst [vmem:[#allocation3] sm:$0xff] %v487
      %490 = vst [vmem:[#allocation3 + $0x8] sm:$0xff] %v488
      %491 = vrot.lane.b32.xlu0 %v479, 16
      %v492 = vpop.permute.xlu0 %491
      %493 = vrot.lane.b32.xlu0 %v480, 16
      %v494 = vpop.permute.xlu0 %493
      %v495 = vsel %vm275, %v492, %v494
      %v496 = vsel %vm275, %v494, %v492
      %v497 = vmul.f32 %v496, %v234
      %v498 = vmul.f32 %v495, %v235
      %499 = vst [vmem:[#allocation3 + $0x10] sm:$0xff] %v497
      %500 = vst [vmem:[#allocation3 + $0x18] sm:$0xff] %v498
      %501 = vrot.lane.b32.xlu0 %v479, 15
      %v502 = vpop.permute.xlu0 %501
      %503 = vrot.lane.b32.xlu0 %v480, 15
      %v504 = vpop.permute.xlu0 %503
      %v505 = vsel %vm292, %v502, %v504
      %v506 = vsel %vm292, %v504, %v502
      %v507 = vmul.f32 %v506, %v295
      %v508 = vmul.f32 %v505, %v296
      %509 = vst [vmem:[#allocation3 + $0x20] sm:$0xff] %v507
      %510 = vst [vmem:[#allocation3 + $0x28] sm:$0xff] %v508
      %511 = vrot.lane.b32.xlu0 %v479, 1
      %v512 = vpop.permute.xlu0 %511
      %513 = vrot.lane.b32.xlu0 %v480, 1
      %v514 = vpop.permute.xlu0 %513
      %v515 = vsel %vm305, %v512, %v514
      %v516 = vsel %vm305, %v514, %v512
      %v517 = vmul.f32 %v516, %v246
      %v518 = vmul.f32 %v515, %v247
      %519 = vst [vmem:[#allocation3 + $0x30] sm:$0xff] %v517
      %520 = vst [vmem:[#allocation3 + $0x38] sm:$0xff] %v518
      %521 = vst [vmem:[#allocation3 + $0x40] sm:$0xff] %v479
      %522 = vst [vmem:[#allocation3 + $0x48] sm:$0xff] %v480
      %523 = vrot.lane.b32.xlu0 %v479, 127
      %v524 = vpop.permute.xlu0 %523
      %525 = vrot.lane.b32.xlu0 %v480, 127
      %v526 = vpop.permute.xlu0 %525
      %v527 = vsel %vm324, %v524, %v526
      %v528 = vsel %vm324, %v526, %v524
      %v529 = vmul.f32 %v527, %v252
      %v530 = vmul.f32 %v528, %v253
      %531 = vst [vmem:[#allocation3 + $0x50] sm:$0xff] %v529
      %532 = vst [vmem:[#allocation3 + $0x58] sm:$0xff] %v530
      %533 = vrot.lane.b32.xlu0 %v479, 113
      %v534 = vpop.permute.xlu0 %533
      %535 = vrot.lane.b32.xlu0 %v480, 113
      %v536 = vpop.permute.xlu0 %535
      %v537 = vsel %vm341, %v534, %v536
      %v538 = vsel %vm341, %v536, %v534
      %v539 = vmul.f32 %v537, %v344
      %v540 = vmul.f32 %v538, %v345
      %541 = vst [vmem:[#allocation3 + $0x60] sm:$0xff] %v539
      %542 = vst [vmem:[#allocation3 + $0x68] sm:$0xff] %v540
      %543 = vrot.lane.b32.xlu0 %v479, 112
      %v544 = vpop.permute.xlu0 %543
      %545 = vrot.lane.b32.xlu0 %v480, 112
      %v546 = vpop.permute.xlu0 %545
      %v547 = vsel %vm354, %v544, %v546
      %v548 = vsel %vm354, %v546, %v544
      %v549 = vmul.f32 %v547, %v240
      %v550 = vmul.f32 %v548, %v241
      %551 = vst [vmem:[#allocation3 + $0x70] sm:$0xff] %v549
      %552 = vst [vmem:[#allocation3 + $0x78] sm:$0xff] %v550
      %553 = vrot.lane.b32.xlu0 %v479, 111
      %v554 = vpop.permute.xlu0 %553
      %555 = vrot.lane.b32.xlu0 %v480, 111
      %v556 = vpop.permute.xlu0 %555
      %v557 = vsel %vm371, %v554, %v556
      %v558 = vsel %vm371, %v556, %v554
      %v559 = vmul.f32 %v557, %v374
      %v560 = vmul.f32 %v558, %v375
      %561 = vst [vmem:[#allocation3 + $0x80] sm:$0xff] %v559
      %562 = vst [vmem:[#allocation3 + $0x88] sm:$0xff] %v560
      %v563 = vld [vmem:[#allocation3] sm:$0xff]
      %v564 = vld [vmem:[#allocation3 + $0x8] sm:$0xff]
      %v565 = vld [vmem:[#allocation3 + $0x10] sm:$0xff]
      %v566 = vld [vmem:[#allocation3 + $0x18] sm:$0xff]
      %v567 = vld [vmem:[#allocation3 + $0x20] sm:$0xff]
      %v568 = vld [vmem:[#allocation3 + $0x28] sm:$0xff]
      %v569 = vld [vmem:[#allocation3 + $0x30] sm:$0xff]
      %v570 = vld [vmem:[#allocation3 + $0x38] sm:$0xff]
      %v571 = vld [vmem:[#allocation3 + $0x40] sm:$0xff]
      %v572 = vld [vmem:[#allocation3 + $0x48] sm:$0xff]
      %v573 = vld [vmem:[#allocation3 + $0x50] sm:$0xff]
      %v574 = vld [vmem:[#allocation3 + $0x58] sm:$0xff]
      %v575 = vld [vmem:[#allocation3 + $0x60] sm:$0xff]
      %v576 = vld [vmem:[#allocation3 + $0x68] sm:$0xff]
      %v577 = vld [vmem:[#allocation3 + $0x70] sm:$0xff]
      %v578 = vld [vmem:[#allocation3 + $0x78] sm:$0xff]
      %v579 = vld [vmem:[#allocation3 + $0x80] sm:$0xff]
      %v580 = vld [vmem:[#allocation3 + $0x88] sm:$0xff]
      %v581 = vld [vmem:[%s3] sm:$0xff]
      %v582 = vld [vmem:[%s4] sm:$0xff]
      %584 = vset.pattern.permute.xlu0 0
      %585 = vperm.xlu0 %584, %v582
      %v586 = vpop.permute.xlu0 %585
      %vm588 = vcmask 588800
      %v590 = vsel %vm588, %v581, 0
      %592 = vmatprep.subr.mxu0 0.0
      %593 = vmatpush1.msra.mxu0 0.0
      %594 = vmatprep.subr.mxu0 0.0
      %595 = vmatpush1.msra.mxu0 0.0
      %596 = vmatprep.subr.mxu0 0.0
      %597 = vmatpush1.msra.mxu0 0.0
      %598 = vmatprep.subr.mxu0 0.0
      %599 = vmatpush1.msra.mxu0 0.0
      %600 = vmatprep.subr.mxu0 0.0
      %601 = vmatpush1.msra.mxu0 0.0
      %602 = vmatprep.subr.mxu0 0.0
      %603 = vmatpush1.msra.mxu0 0.0
      %604 = vmatprep.subr.mxu0 0.0
      %605 = vmatpush1.msra.mxu0 0.0
      %606 = vmatprep.subr.mxu0 %v580
      %607 = vmatpush1.msra.mxu0 %v579
      %608 = vmatprep.subr.mxu0 %v578
      %609 = vmatpush1.msra.mxu0 %v577
      %610 = vmatprep.subr.mxu0 %v576
      %611 = vmatpush1.msra.mxu0 %v575
      %612 = vmatprep.subr.mxu0 %v574
      %613 = vmatpush1.msra.mxu0 %v573
      %614 = vmatprep.subr.mxu0 %v572
      %615 = vmatpush1.msra.mxu0 %v571
      %616 = vmatprep.subr.mxu0 %v570
      %617 = vmatpush1.msra.mxu0 %v569
      %618 = vmatprep.subr.mxu0 %v568
      %619 = vmatpush1.msra.mxu0 %v567
      %620 = vmatprep.subr.mxu0 %v566
      %621 = vmatpush1.msra.mxu0 %v565
      %622 = vmatprep.subr.mxu0 %v564
      %623 = vmatpush1.msra.mxu0 %v563
      %624 = vmatprep.subr.mxu0 0.0
      %625 = vmatpush2.msra.mxu0 0.0
      %626 = vmatprep.subr.mxu0 0.0
      %627 = vmatpush2.msra.mxu0 0.0
      %628 = vmatprep.subr.mxu0 0.0
      %629 = vmatpush2.msra.mxu0 0.0
      %630 = vmatprep.subr.mxu0 0.0
      %631 = vmatpush2.msra.mxu0 0.0
      %632 = vmatprep.subr.mxu0 0.0
      %633 = vmatpush2.msra.mxu0 0.0
      %634 = vmatprep.subr.mxu0 0.0
      %635 = vmatpush2.msra.mxu0 0.0
      %636 = vmatprep.subr.mxu0 0.0
      %637 = vmatpush2.msra.mxu0 0.0
      %638 = vmatprep.subr.mxu0 0.0
      %639 = vmatpush2.msra.mxu0 0.0
      %640 = vmatprep.subr.mxu0 0.0
      %641 = vmatpush2.msra.mxu0 0.0
      %642 = vmatprep.subr.mxu0 0.0
      %643 = vmatpush2.msra.mxu0 0.0
      %644 = vmatprep.subr.mxu0 0.0
      %645 = vmatpush2.msra.mxu0 0.0
      %646 = vmatprep.subr.mxu0 0.0
      %647 = vmatpush2.msra.mxu0 0.0
      %648 = vmatprep.subr.mxu0 0.0
      %649 = vmatpush2.msra.mxu0 0.0
      %650 = vmatprep.subr.mxu0 0.0
      %651 = vmatpush2.msra.mxu0 0.0
      %652 = vmatprep.subr.mxu0 0.0
      %653 = vmatpush2.msra.mxu0 0.0
      %654 = vmatprep.subr.mxu0 0.0
      %655 = vmatpush2.msra.mxu0 0.0
      %656 = vmatprep.mubr.f32.mxu0 0.0
      %657 = vmatmul.mubr.f32.gmra.mxu0 %v590
      %v658 = vpop.f32.mrf.mxu0
      %v659 = vadd.f32 %v586, %v658
      %v660 = vpop.f32.mrf.mxu0
      %v661 = vadd.f32 %v586, %v660
      %662 = vdwg.mxu0
      %v663 = vmax.f32 %v659, 0.0
      %v664 = vmax.f32 %v661, 0.0
      %665 = vst [vmem:[%s224] sm:$0xff] %v663
      %666 = vst [vmem:[%s224 + $0x8] sm:$0xff] %v664
      %p667 = scmp.lt.s32.totalorder %s16, 1
      %s668 = scalar_select %p667, %s16, 1
      %s669 = smul.addr %s668, 2
      %s670 = smul.addr %s669, 8
      %s671 = scalar_lea.vmem %s5, %s670
      // Predicated region
      $region41: #{double_conv.1} parent=39 // pred_check
        %p672 = pneg %p144
      $region42: #{double_conv.1} parent=39 // pred_check_branch
        %674 = sbr.rel (%p672) target = $region44
      $region43: #{double_conv.1} parent=39 // pred_region
        _
      $region44: #{double_conv.1} parent=39 // pred_fallthru
        _
    $region40: #{double_conv.1} parent=5 // pred_fallthru
      _
    %p675 = scmp.le.s32.totalorder 2, %s11
    // Predicated region
    $region45: #{double_conv.1} parent=5 // pred_check
      %p676 = pneg %p675
    $region46: #{double_conv.1} parent=5 // pred_check_branch
      %678 = sbr.rel (%p676) target = $region48
    $region47: #{double_conv.1} parent=5 // pred_region
      %s679 = ssub.s32 %s11, 2
      // Predicated region
      $region49: #{double_conv.1} parent=47 // pred_check
        %p680 = pneg %p150
      $region50: #{double_conv.1} parent=47 // pred_check_branch
        %682 = sbr.rel (%p680) target = $region52
      $region51: #{double_conv.1} parent=47 // pred_region
        %p683 = scmp.lt.s32.totalorder %s17, 1
        %s684 = scalar_select %p683, %s17, 1
        %s685 = smul.addr %s684, 2
        %s686 = smul.addr %s685, 8
        %s687 = scalar_lea.vmem %s5, %s686
      $region52: #{double_conv.1} parent=47 // pred_fallthru
        _
    $region48: #{double_conv.1} parent=5 // pred_fallthru
      _
  $region6: #{double_conv.1} parent=0 // loop_footer
    %s15 = sadd.s32 1, %s11
  $region7: #{double_conv.1} parent=0 // loop_footer_branch
    %10 = sbr.rel target = $region3
  $region8: #{double_conv.1} parent=0 // loop_exit
    _

</llo_original>
